<compile_context>
chip_gen: v7x
topology: tpu7x:2x2x1
jax: 0.10.0
libtpu: 0.0.40
codegen_flags: <defaults>
</compile_context>

<pallas_src>
import functools

import jax
import jax.numpy as jnp
from jax.experimental import pallas as pl
from jax.experimental.pallas import tpu as pltpu


def _concat_attention_kernel(img_ref, qf_ref, qg_ref,
                             wfi_ref, wgi_ref, wlc_ref,
                             out_ref):
    tb, L, d_img = img_ref.shape
    H = wfi_ref.shape[1]

    # Merge (batch_tile, L) so the two big matmuls run as one
    # (tb*L, D_img) @ (D_img, H) MXU op (lane dim unchanged; free when L % 8 == 0).
    img = img_ref[...].reshape(tb * L, d_img)                         # bf16

    pre_f = jnp.dot(img, wfi_ref[...],
                    preferred_element_type=jnp.float32).reshape(tb, L, H)
    pre_g = jnp.dot(img, wgi_ref[...],
                    preferred_element_type=jnp.float32).reshape(tb, L, H)

    # Question-side projections (already include the fa biases), broadcast over L.
    pre_f = pre_f + qf_ref[...]                                       # (tb,1,H) -> (tb,L,H)
    pre_g = pre_g + qg_ref[...]

    # GatedTanh (tanh and sigmoid run on the EUP/VPU in f32).
    h = jnp.tanh(pre_f) * jax.nn.sigmoid(pre_g)                       # (tb, L, H) f32

    # lc: Linear(H, 1) as a VPU multiply + lane reduction (avoids an N=1 MXU
    # matmul).  b_lc omitted: softmax over L is shift-invariant.
    score = jnp.sum(h * wlc_ref[...], axis=-1)                        # (tb, L)

    # softmax over locations (torch dim=1); divide via approx reciprocal (EUP).
    m = jnp.max(score, axis=-1, keepdims=True)
    e = jnp.exp(score - m)
    inv = pl.reciprocal(jnp.sum(e, axis=-1, keepdims=True), approx=True)
    out_ref[...] = (e * inv)[:, None, :].astype(out_ref.dtype)        # (tb, 1, L)


def prepare_attention_params(params, image_feat_dim):
    """One-time weight prep (cache the result across calls).

    Splits the concat-Linear weights into image/text halves, transposes to
    (in, out) row-major layout, and casts the MXU operands to bf16.
    """
    H, _ = params["w_fc"].shape
    D_img = image_feat_dim
    return {
        # image halves -> kernel MXU operands (bf16)
        "wfi": jnp.asarray(params["w_fc"][:, :D_img].T, dtype=jnp.bfloat16),    # (D_img, H)
        "wgi": jnp.asarray(params["w_gate"][:, :D_img].T, dtype=jnp.bfloat16),  # (D_img, H)
        # text halves + biases -> precomputed outside the kernel (f32)
        "wft": jnp.asarray(params["w_fc"][:, D_img:].T, dtype=jnp.float32),     # (D_txt, H)
        "wgt": jnp.asarray(params["w_gate"][:, D_img:].T, dtype=jnp.float32),   # (D_txt, H)
        "b_fc": params["b_fc"].reshape(1, H).astype(jnp.float32),
        "b_gate": params["b_gate"].reshape(1, H).astype(jnp.float32),
        # lc weight row for the VPU reduce; b_lc dropped (softmax shift-invariant)
        "wlc": params["w_lc"].reshape(1, 1, H).astype(jnp.float32),
    }


def concatenation_attention(image_feat, question_embedding, prep, *, batch_tile=None):
    B, L, D_img = image_feat.shape
    H = prep["wfi"].shape[1]

    if batch_tile is None:
        batch_tile = next(t for t in (8, 4, 2, 1) if t <= B and B % t == 0)
    assert B % batch_tile == 0, "batch_tile must divide batch size"

    # Question-side projections (include fa biases) — cheap dense XLA matmuls.
    qf = (question_embedding.astype(jnp.float32) @ prep["wft"]
          + prep["b_fc"]).reshape(B, 1, H)
    qg = (question_embedding.astype(jnp.float32) @ prep["wgt"]
          + prep["b_gate"]).reshape(B, 1, H)

    img_bf16 = image_feat.astype(jnp.bfloat16)

    att = pl.pallas_call(
        _concat_attention_kernel,
        out_shape=jax.ShapeDtypeStruct((B, 1, L), jnp.float32),
        grid=(B // batch_tile,),
        in_specs=[
            pl.BlockSpec((batch_tile, L, D_img), lambda b: (b, 0, 0)),  # image_feat tile
            pl.BlockSpec((batch_tile, 1, H), lambda b: (b, 0, 0)),      # q_f projection
            pl.BlockSpec((batch_tile, 1, H), lambda b: (b, 0, 0)),      # q_g projection
            pl.BlockSpec((D_img, H), lambda b: (0, 0)),                 # W_fi (resident)
            pl.BlockSpec((D_img, H), lambda b: (0, 0)),                 # W_gi (resident)
            pl.BlockSpec((1, 1, H), lambda b: (0, 0, 0)),               # lc weight row
        ],
        out_specs=pl.BlockSpec((batch_tile, 1, L), lambda b: (b, 0, 0)),
        compiler_params=pltpu.CompilerParams(dimension_semantics=("parallel",)),
    )(img_bf16, qf, qg, prep["wfi"], prep["wgi"], prep["wlc"])

    # Module semantics: attention_weights.expand_as(image_feat).  This broadcast
    # lives outside the kernel (the kernel only writes B*L values); downstream
    # consumers fuse it into their weighted sum.
    att = att.reshape(B, L, 1)
    return jnp.broadcast_to(att, (B, L, D_img)).astype(image_feat.dtype)


def _reference(image_feat, question_embedding, params):
    B, L, D_img = image_feat.shape
    q_expand = jnp.broadcast_to(question_embedding[:, None, :],
                                (B, L, question_embedding.shape[-1]))
    concat = jnp.concatenate([image_feat, q_expand], axis=2)
    y = jnp.tanh(concat @ params["w_fc"].T + params["b_fc"])
    g = jax.nn.sigmoid(concat @ params["w_gate"].T + params["b_gate"])
    h = y * g
    raw = h @ params["w_lc"].T + params["b_lc"]                  # (B, L, 1)
    att = jax.nn.softmax(raw, axis=1)
    return jnp.broadcast_to(att, image_feat.shape)


def _init_params(key, D_img, D_txt, H):
    D_in = D_img + D_txt
    ks = jax.random.split(key, 6)
    bound_fa = 1.0 / jnp.sqrt(D_in)
    bound_lc = 1.0 / jnp.sqrt(H)
    return {
        "w_fc":   jax.random.uniform(ks[0], (H, D_in), jnp.float32, -bound_fa, bound_fa),
        "b_fc":   jax.random.uniform(ks[1], (H,),      jnp.float32, -bound_fa, bound_fa),
        "w_gate": jax.random.uniform(ks[2], (H, D_in), jnp.float32, -bound_fa, bound_fa),
        "b_gate": jax.random.uniform(ks[3], (H,),      jnp.float32, -bound_fa, bound_fa),
        "w_lc":   jax.random.uniform(ks[4], (1, H),    jnp.float32, -bound_lc, bound_lc),
        "b_lc":   jax.random.uniform(ks[5], (1,),      jnp.float32, -bound_lc, bound_lc),
    }


if __name__ == "__main__":
    B, L, D_img, D_txt, H = 4, 16, 32, 16, 32

    root = jax.random.PRNGKey(0)
    k_img, k_q, k_par = jax.random.split(root, 3)

    image_feat = jax.random.normal(k_img, (B, L, D_img), jnp.float32)
    question_embedding = jax.random.normal(k_q, (B, D_txt), jnp.float32)
    params = _init_params(k_par, D_img, D_txt, H)

    # One-time weight prep (hoisted out of the per-call path).
    prep = prepare_attention_params(params, D_img)

    attn_fn = jax.jit(functools.partial(concatenation_attention,
                                        prep=prep, batch_tile=2))
    out = attn_fn(image_feat, question_embedding)
    out = jax.block_until_ready(out)

    ref = _reference(image_feat, question_embedding, params)
    assert out.shape == (B, L, D_img)
    # bf16 MXU inputs + approx reciprocal -> relaxed (but still tight) tolerance.
    assert jnp.allclose(out, ref, atol=5e-3, rtol=5e-3), "mismatch vs reference"

    print("KERNEL_OK")
</pallas_src>

<mosaic_0001>
module attributes {stable_mosaic.version = 11 : i64} {
  func.func @_concat_attention_kernel(%arg0: i32, %arg1: memref<2x16x32xbf16, #tpu.memory_space<vmem>>, %arg2: memref<2x1x32xf32, #tpu.memory_space<vmem>>, %arg3: memref<2x1x32xf32, #tpu.memory_space<vmem>>, %arg4: memref<32x32xbf16, #tpu.memory_space<vmem>>, %arg5: memref<32x32xbf16, #tpu.memory_space<vmem>>, %arg6: memref<1x1x32xf32, #tpu.memory_space<vmem>>, %arg7: memref<2x1x16xf32, #tpu.memory_space<vmem>>) attributes {dimension_semantics = [#tpu.dimension_semantics<parallel>], iteration_bounds = array<i64: 2>, scalar_prefetch = 0 : i64, scratch_operands = 0 : i64, tpu.core_type = #tpu.core_type<tc>, window_params = [{transform_indices = @transform_0, window_bounds = array<i64: 2, 16, 32>}, {transform_indices = @transform_1, window_bounds = array<i64: 2, 1, 32>}, {transform_indices = @transform_2, window_bounds = array<i64: 2, 1, 32>}, {pipeline_mode = #tpu.pipeline_mode<synchronous>, transform_indices = @transform_3, window_bounds = array<i64: 32, 32>}, {pipeline_mode = #tpu.pipeline_mode<synchronous>, transform_indices = @transform_4, window_bounds = array<i64: 32, 32>}, {pipeline_mode = #tpu.pipeline_mode<synchronous>, transform_indices = @transform_5, window_bounds = array<i64: 1, 1, 32>}, {transform_indices = @transform_6, window_bounds = array<i64: 2, 1, 16>}]} {
    %c0 = arith.constant 0 : index
    %c0_0 = arith.constant 0 : index
    %c0_1 = arith.constant 0 : index
    %0 = vector.load %arg1[%c0, %c0_0, %c0_1] : memref<2x16x32xbf16, #tpu.memory_space<vmem>>, vector<2x16x32xbf16>
    %1 = vector.shape_cast %0 : vector<2x16x32xbf16> to vector<32x32xbf16>
    %c0_2 = arith.constant 0 : index
    %c0_3 = arith.constant 0 : index
    %2 = vector.load %arg4[%c0_2, %c0_3] : memref<32x32xbf16, #tpu.memory_space<vmem>>, vector<32x32xbf16>
    %cst = arith.constant dense<0.000000e+00> : vector<32x32xf32>
    %3 = tpu.matmul %1, %2, %cst {dimension_numbers = #tpu.dot_dimension_numbers<[1], [0], [0], [1], [0, 0, 1, 1], [], []>} : vector<32x32xbf16>, vector<32x32xbf16>, vector<32x32xf32> -> vector<32x32xf32>
    %4 = vector.shape_cast %3 : vector<32x32xf32> to vector<2x16x32xf32>
    %c0_4 = arith.constant 0 : index
    %c0_5 = arith.constant 0 : index
    %5 = vector.load %arg5[%c0_4, %c0_5] : memref<32x32xbf16, #tpu.memory_space<vmem>>, vector<32x32xbf16>
    %cst_6 = arith.constant dense<0.000000e+00> : vector<32x32xf32>
    %6 = tpu.matmul %1, %5, %cst_6 {dimension_numbers = #tpu.dot_dimension_numbers<[1], [0], [0], [1], [0, 0, 1, 1], [], []>} : vector<32x32xbf16>, vector<32x32xbf16>, vector<32x32xf32> -> vector<32x32xf32>
    %7 = vector.shape_cast %6 : vector<32x32xf32> to vector<2x16x32xf32>
    %c0_7 = arith.constant 0 : index
    %c0_8 = arith.constant 0 : index
    %c0_9 = arith.constant 0 : index
    %8 = vector.load %arg2[%c0_7, %c0_8, %c0_9] : memref<2x1x32xf32, #tpu.memory_space<vmem>>, vector<2x1x32xf32>
    %9 = vector.broadcast %8 : vector<2x1x32xf32> to vector<2x16x32xf32>
    %10 = arith.addf %4, %9 : vector<2x16x32xf32>
    %c0_10 = arith.constant 0 : index
    %c0_11 = arith.constant 0 : index
    %c0_12 = arith.constant 0 : index
    %11 = vector.load %arg3[%c0_10, %c0_11, %c0_12] : memref<2x1x32xf32, #tpu.memory_space<vmem>>, vector<2x1x32xf32>
    %12 = vector.broadcast %11 : vector<2x1x32xf32> to vector<2x16x32xf32>
    %13 = arith.addf %7, %12 : vector<2x16x32xf32>
    %14 = math.tanh %10 : vector<2x16x32xf32>
    %15 = arith.negf %13 : vector<2x16x32xf32>
    %16 = math.exp %15 : vector<2x16x32xf32>
    %cst_13 = arith.constant 1.000000e+00 : f32
    %17 = vector.broadcast %cst_13 : f32 to vector<2x16x32xf32>
    %18 = arith.addf %17, %16 : vector<2x16x32xf32>
    %19 = arith.divf %17, %18 : vector<2x16x32xf32>
    %20 = arith.mulf %14, %19 : vector<2x16x32xf32>
    %c0_14 = arith.constant 0 : index
    %c0_15 = arith.constant 0 : index
    %c0_16 = arith.constant 0 : index
    %21 = vector.load %arg6[%c0_14, %c0_15, %c0_16] : memref<1x1x32xf32, #tpu.memory_space<vmem>>, vector<1x1x32xf32>
    %22 = vector.broadcast %21 : vector<1x1x32xf32> to vector<2x16x32xf32>
    %23 = arith.mulf %20, %22 : vector<2x16x32xf32>
    %cst_17 = arith.constant dense<0.000000e+00> : vector<2x16xf32>
    %24 = vector.multi_reduction <add>, %23, %cst_17 [2] : vector<2x16x32xf32> to vector<2x16xf32>
    %cst_18 = arith.constant dense<0xFF800000> : vector<2xf32>
    %25 = vector.multi_reduction <maximumf>, %24, %cst_18 [1] : vector<2x16xf32> to vector<2xf32>
    %26 = vector.shape_cast %25 : vector<2xf32> to vector<2x1xf32>
    %27 = vector.broadcast %26 : vector<2x1xf32> to vector<2x16xf32>
    %28 = arith.subf %24, %27 : vector<2x16xf32>
    %29 = math.exp %28 : vector<2x16xf32>
    %cst_19 = arith.constant dense<0.000000e+00> : vector<2xf32>
    %30 = vector.multi_reduction <add>, %29, %cst_19 [1] : vector<2x16xf32> to vector<2xf32>
    %31 = vector.shape_cast %30 : vector<2xf32> to vector<2x1xf32>
    %32 = tpu.reciprocal %31 {approx = true} : vector<2x1xf32> -> vector<2x1xf32>
    %33 = vector.broadcast %32 : vector<2x1xf32> to vector<2x16xf32>
    %34 = arith.mulf %29, %33 : vector<2x16xf32>
    %35 = vector.shape_cast %34 : vector<2x16xf32> to vector<2x1x16xf32>
    %c0_20 = arith.constant 0 : index
    %c0_21 = arith.constant 0 : index
    %c0_22 = arith.constant 0 : index
    %36 = vector.load %arg7[%c0_20, %c0_21, %c0_22] : memref<2x1x16xf32, #tpu.memory_space<vmem>>, vector<2x1x16xf32>
    tpu.vector_store %arg7[%c0_20, %c0_21, %c0_22], %35 {strides = array<i32>} : memref<2x1x16xf32, #tpu.memory_space<vmem>>, vector<2x1x16xf32>,
    return
  }
  func.func @transform_0(%arg0: i32) -> (i32, i32, i32) {
    %c0_i32 = arith.constant 0 : i32
    %c0_i32_0 = arith.constant 0 : i32
    %c0_i32_1 = arith.constant 0 : i32
    return %arg0, %c0_i32, %c0_i32_0 : i32, i32, i32
  }
  func.func @transform_1(%arg0: i32) -> (i32, i32, i32) {
    %c0_i32 = arith.constant 0 : i32
    %c0_i32_0 = arith.constant 0 : i32
    %c0_i32_1 = arith.constant 0 : i32
    return %arg0, %c0_i32, %c0_i32_0 : i32, i32, i32
  }
  func.func @transform_2(%arg0: i32) -> (i32, i32, i32) {
    %c0_i32 = arith.constant 0 : i32
    %c0_i32_0 = arith.constant 0 : i32
    %c0_i32_1 = arith.constant 0 : i32
    return %arg0, %c0_i32, %c0_i32_0 : i32, i32, i32
  }
  func.func @transform_3(%arg0: i32) -> (i32, i32) {
    %c0_i32 = arith.constant 0 : i32
    %c0_i32_0 = arith.constant 0 : i32
    %c0_i32_1 = arith.constant 0 : i32
    return %c0_i32, %c0_i32_0 : i32, i32
  }
  func.func @transform_4(%arg0: i32) -> (i32, i32) {
    %c0_i32 = arith.constant 0 : i32
    %c0_i32_0 = arith.constant 0 : i32
    %c0_i32_1 = arith.constant 0 : i32
    return %c0_i32, %c0_i32_0 : i32, i32
  }
  func.func @transform_5(%arg0: i32) -> (i32, i32, i32) {
    %c0_i32 = arith.constant 0 : i32
    %c0_i32_0 = arith.constant 0 : i32
    %c0_i32_1 = arith.constant 0 : i32
    %c0_i32_2 = arith.constant 0 : i32
    return %c0_i32, %c0_i32_0, %c0_i32_1 : i32, i32, i32
  }
  func.func @transform_6(%arg0: i32) -> (i32, i32, i32) {
    %c0_i32 = arith.constant 0 : i32
    %c0_i32_0 = arith.constant 0 : i32
    %c0_i32_1 = arith.constant 0 : i32
    return %arg0, %c0_i32, %c0_i32_0 : i32, i32, i32
  }
}

</mosaic_0001>

<llo_original>
// kernel: concatenation_attention.1
$region0: #{concatenation_attention.1}
  #allocation0 [shape = 'u32[]', space=smem, size = 0x4, offset = 0x4, fixed_abs, tag = 'smem constant byte address 0x4 - core index']
  #allocation1 [shape = 'u32[144,128]{1,0:T(1,128)}', space=vmem, size = 0x12000, scoped, tag = 'internal scratch']
  %s0 = inlined_call_operand.vmem [shape: bf16[4,16,32], index: 0, kind: input, shape index: {}]
  %s1 = inlined_call_operand.vmem [shape: f32[4,1,32], index: 1, kind: input, shape index: {}]
  %s2 = inlined_call_operand.vmem [shape: f32[4,1,32], index: 2, kind: input, shape index: {}]
  %s3 = inlined_call_operand.vmem [shape: bf16[32,32], index: 3, kind: input, shape index: {}]
  %s4 = inlined_call_operand.vmem [shape: bf16[32,32], index: 4, kind: input, shape index: {}]
  %s5 = inlined_call_operand.vmem [shape: f32[1,1,32], index: 5, kind: input, shape index: {}]
  %s6 = inlined_call_operand.vmem [shape: f32[4,1,16], index: 6, kind: output, shape index: {}]
  %s7 = sld [smem:[#allocation0]]
  $region57: #{concatenation_attention.1} parent=0
    _
  %s9 = ssub.s32 1, %s7
  %s10 = scalar_select 0, %s9, %s7
  loop: start=0, step=1, limit=4
  $region2: #{concatenation_attention.1} parent=0 // loop_pre_header
    _
  $region3: #{concatenation_attention.1} parent=0 // loop_header
    %s12 = sphi 0, %s16
    %p13 = scmp.ge.s32.totalorder %s12, 4
    %s22 = sphi 0, %s24
    %s25 = sphi 0, %s22
    %s26 = sphi 0, %s25
    %s42 = sphi 0, %s26
    %s48 = sphi 0, %s50
    %s51 = sphi 0, %s48
    %s52 = sphi 0, %s51
    %s68 = sphi 0, %s52
    %s74 = sphi 0, %s76
    %s77 = sphi 0, %s74
    %s78 = sphi 0, %s77
    %s94 = sphi 0, %s78
    %s98 = sphi 0, %s98
    %s100 = sphi 0, %s98
    %s101 = sphi 0, %s100
    %s115 = sphi 0, %s101
    %s119 = sphi 0, %s119
    %s121 = sphi 0, %s119
    %s122 = sphi 0, %s121
    %s136 = sphi 0, %s122
    %s140 = sphi 0, %s140
    %s142 = sphi 0, %s140
    %s143 = sphi 0, %s142
    %s157 = sphi 0, %s143
    %s163 = sphi 0, %s165
    %s166 = sphi 0, %s163
    %s167 = sphi 0, %s166
    %s183 = sphi 0, %s167
  $region4: #{concatenation_attention.1} parent=0 // loop_header_branch
    %15 = sbr.rel (%p13) target = $region8
  $region5: #{concatenation_attention.1} parent=0 // loop_body
    %s17 = ssub.s32 %s12, 1
    %s18 = ssub.s32 %s12, 2
    %s19 = sadd.s32 %s12, 1
    %s20 = ssub.s32 %s12, %s19
    %p21 = scmp.eq.s32.totalorder %s20, 0
    %s23 = sadd.s32 %s22, 1
    %s24 = scalar_select %p21, %s22, %s23
    %p27 = pneg %p21
    %p28 = scmp.eq.s32.totalorder %s12, 1
    %p29 = por %p27, %p28
    %p30 = scmp.ne.s32.totalorder %s22, %s25
    %p31 = scmp.eq.s32.totalorder %s12, 0
    %p32 = por %p30, %p31
    %p33 = scmp.ne.s32.totalorder %s22, %s25
    %p34 = scmp.eq.s32.totalorder %s17, 1
    %p35 = por %p33, %p34
    %p36 = scmp.ne.s32.totalorder %s25, %s26
    %p37 = scmp.eq.s32.totalorder %s17, 0
    %p38 = por %p36, %p37
    %p39 = scmp.ne.s32.totalorder %s25, %s26
    %p40 = scmp.eq.s32.totalorder %s18, 1
    %p41 = por %p39, %p40
    %p43 = scmp.ne.s32.totalorder %s26, %s42
    %p44 = scmp.eq.s32.totalorder %s18, 0
    %p45 = por %p43, %p44
    %s46 = ssub.s32 %s12, %s19
    %p47 = scmp.eq.s32.totalorder %s46, 0
    %s49 = sadd.s32 %s48, 1
    %s50 = scalar_select %p47, %s48, %s49
    %p53 = pneg %p47
    %p54 = scmp.eq.s32.totalorder %s12, 1
    %p55 = por %p53, %p54
    %p56 = scmp.ne.s32.totalorder %s48, %s51
    %p57 = scmp.eq.s32.totalorder %s12, 0
    %p58 = por %p56, %p57
    %p59 = scmp.ne.s32.totalorder %s48, %s51
    %p60 = scmp.eq.s32.totalorder %s17, 1
    %p61 = por %p59, %p60
    %p62 = scmp.ne.s32.totalorder %s51, %s52
    %p63 = scmp.eq.s32.totalorder %s17, 0
    %p64 = por %p62, %p63
    %p65 = scmp.ne.s32.totalorder %s51, %s52
    %p66 = scmp.eq.s32.totalorder %s18, 1
    %p67 = por %p65, %p66
    %p69 = scmp.ne.s32.totalorder %s52, %s68
    %p70 = scmp.eq.s32.totalorder %s18, 0
    %p71 = por %p69, %p70
    %s72 = ssub.s32 %s12, %s19
    %p73 = scmp.eq.s32.totalorder %s72, 0
    %s75 = sadd.s32 %s74, 1
    %s76 = scalar_select %p73, %s74, %s75
    %p79 = pneg %p73
    %p80 = scmp.eq.s32.totalorder %s12, 1
    %p81 = por %p79, %p80
    %p82 = scmp.ne.s32.totalorder %s74, %s77
    %p83 = scmp.eq.s32.totalorder %s12, 0
    %p84 = por %p82, %p83
    %p85 = scmp.ne.s32.totalorder %s74, %s77
    %p86 = scmp.eq.s32.totalorder %s17, 1
    %p87 = por %p85, %p86
    %p88 = scmp.ne.s32.totalorder %s77, %s78
    %p89 = scmp.eq.s32.totalorder %s17, 0
    %p90 = por %p88, %p89
    %p91 = scmp.ne.s32.totalorder %s77, %s78
    %p92 = scmp.eq.s32.totalorder %s18, 1
    %p93 = por %p91, %p92
    %p95 = scmp.ne.s32.totalorder %s78, %s94
    %p96 = scmp.eq.s32.totalorder %s18, 0
    %p97 = por %p95, %p96
    %s99 = sadd.s32 %s98, 1
    %p102 = scmp.eq.s32.totalorder %s12, 1
    %p103 = scmp.ne.s32.totalorder %s98, %s100
    %p104 = scmp.eq.s32.totalorder %s12, 0
    %p105 = por %p103, %p104
    %p106 = scmp.ne.s32.totalorder %s98, %s100
    %p107 = scmp.eq.s32.totalorder %s17, 1
    %p108 = por %p106, %p107
    %p109 = scmp.ne.s32.totalorder %s100, %s101
    %p110 = scmp.eq.s32.totalorder %s17, 0
    %p111 = por %p109, %p110
    %p112 = scmp.ne.s32.totalorder %s100, %s101
    %p113 = scmp.eq.s32.totalorder %s18, 1
    %p114 = por %p112, %p113
    %p116 = scmp.ne.s32.totalorder %s101, %s115
    %p117 = scmp.eq.s32.totalorder %s18, 0
    %p118 = por %p116, %p117
    %s120 = sadd.s32 %s119, 1
    %p123 = scmp.eq.s32.totalorder %s12, 1
    %p124 = scmp.ne.s32.totalorder %s119, %s121
    %p125 = scmp.eq.s32.totalorder %s12, 0
    %p126 = por %p124, %p125
    %p127 = scmp.ne.s32.totalorder %s119, %s121
    %p128 = scmp.eq.s32.totalorder %s17, 1
    %p129 = por %p127, %p128
    %p130 = scmp.ne.s32.totalorder %s121, %s122
    %p131 = scmp.eq.s32.totalorder %s17, 0
    %p132 = por %p130, %p131
    %p133 = scmp.ne.s32.totalorder %s121, %s122
    %p134 = scmp.eq.s32.totalorder %s18, 1
    %p135 = por %p133, %p134
    %p137 = scmp.ne.s32.totalorder %s122, %s136
    %p138 = scmp.eq.s32.totalorder %s18, 0
    %p139 = por %p137, %p138
    %s141 = sadd.s32 %s140, 1
    %p144 = scmp.eq.s32.totalorder %s12, 1
    %p145 = scmp.ne.s32.totalorder %s140, %s142
    %p146 = scmp.eq.s32.totalorder %s12, 0
    %p147 = por %p145, %p146
    %p148 = scmp.ne.s32.totalorder %s140, %s142
    %p149 = scmp.eq.s32.totalorder %s17, 1
    %p150 = por %p148, %p149
    %p151 = scmp.ne.s32.totalorder %s142, %s143
    %p152 = scmp.eq.s32.totalorder %s17, 0
    %p153 = por %p151, %p152
    %p154 = scmp.ne.s32.totalorder %s142, %s143
    %p155 = scmp.eq.s32.totalorder %s18, 1
    %p156 = por %p154, %p155
    %p158 = scmp.ne.s32.totalorder %s143, %s157
    %p159 = scmp.eq.s32.totalorder %s18, 0
    %p160 = por %p158, %p159
    %s161 = ssub.s32 %s12, %s19
    %p162 = scmp.eq.s32.totalorder %s161, 0
    %s164 = sadd.s32 %s163, 1
    %s165 = scalar_select %p162, %s163, %s164
    %p168 = pneg %p162
    %p169 = scmp.eq.s32.totalorder %s12, 1
    %p170 = por %p168, %p169
    %p171 = scmp.ne.s32.totalorder %s163, %s166
    %p172 = scmp.eq.s32.totalorder %s12, 0
    %p173 = por %p171, %p172
    %p174 = scmp.ne.s32.totalorder %s163, %s166
    %p175 = scmp.eq.s32.totalorder %s17, 1
    %p176 = por %p174, %p175
    %p177 = scmp.ne.s32.totalorder %s166, %s167
    %p178 = scmp.eq.s32.totalorder %s17, 0
    %p179 = por %p177, %p178
    %p180 = scmp.ne.s32.totalorder %s166, %s167
    %p181 = scmp.eq.s32.totalorder %s18, 1
    %p182 = por %p180, %p181
    %p184 = scmp.ne.s32.totalorder %s167, %s183
    %p185 = scmp.eq.s32.totalorder %s18, 0
    %p186 = por %p184, %p185
    %p187 = scmp.le.s32.totalorder 1, %s12
    %p188 = scmp.lt.s32.totalorder %s12, 3
    %p189 = pnand %p187, %p188
    %p190 = pneg %p189
    // Predicated region
    $region9: #{concatenation_attention.1} parent=5 // pred_check
      _
    $region10: #{concatenation_attention.1} parent=5 // pred_check_branch
      %192 = sbr.rel (%p189) target = $region12
    $region11: #{concatenation_attention.1} parent=5 // pred_region
      %s193 = ssub.s32 %s12, 1
      // Predicated region
      $region13: #{concatenation_attention.1} parent=11 // pred_check
        %p194 = pneg %p111
      $region14: #{concatenation_attention.1} parent=11 // pred_check_branch
        %196 = sbr.rel (%p194) target = $region16
      $region15: #{concatenation_attention.1} parent=11 // pred_region
        _
      $region16: #{concatenation_attention.1} parent=11 // pred_fallthru
        _
      // Predicated region
      $region17: #{concatenation_attention.1} parent=11 // pred_check
        %p197 = pneg %p132
      $region18: #{concatenation_attention.1} parent=11 // pred_check_branch
        %199 = sbr.rel (%p197) target = $region20
      $region19: #{concatenation_attention.1} parent=11 // pred_region
        _
      $region20: #{concatenation_attention.1} parent=11 // pred_fallthru
        _
      // Predicated region
      $region21: #{concatenation_attention.1} parent=11 // pred_check
        %p200 = pneg %p153
      $region22: #{concatenation_attention.1} parent=11 // pred_check_branch
        %202 = sbr.rel (%p200) target = $region24
      $region23: #{concatenation_attention.1} parent=11 // pred_region
        _
      $region24: #{concatenation_attention.1} parent=11 // pred_fallthru
        _
    $region12: #{concatenation_attention.1} parent=5 // pred_fallthru
      _
    %p203 = scmp.lt.s32.totalorder %s12, 2
    // Predicated region
    $region25: #{concatenation_attention.1} parent=5 // pred_check
      %p204 = pneg %p203
    $region26: #{concatenation_attention.1} parent=5 // pred_check_branch
      %206 = sbr.rel (%p204) target = $region28
    $region27: #{concatenation_attention.1} parent=5 // pred_region
      // Predicated region
      $region29: #{concatenation_attention.1} parent=27 // pred_check
        %p207 = pneg %p32
      $region30: #{concatenation_attention.1} parent=27 // pred_check_branch
        %209 = sbr.rel (%p207) target = $region32
      $region31: #{concatenation_attention.1} parent=27 // pred_region
        %s210 = smul.u32 2, %s12
        %p211 = scmp.lt.s32.totalorder %s210, 3
        %s212 = scalar_select %p211, %s210, 3
        %s213 = smul.addr %s212, 2
        %s214 = smul.addr %s213, 4
        %s215 = scalar_lea.vmem %s0, %s214
        %s216 = smul.u32 2, %s12
      $region32: #{concatenation_attention.1} parent=27 // pred_fallthru
        _
      // Predicated region
      $region33: #{concatenation_attention.1} parent=27 // pred_check
        %p217 = pneg %p58
      $region34: #{concatenation_attention.1} parent=27 // pred_check_branch
        %219 = sbr.rel (%p217) target = $region36
      $region35: #{concatenation_attention.1} parent=27 // pred_region
        %s220 = smul.u32 2, %s12
        %p221 = scmp.lt.s32.totalorder %s220, 3
        %s222 = scalar_select %p221, %s220, 3
        %s223 = scalar_lea.vmem %s1, %s222
        %s224 = smul.u32 2, %s12
      $region36: #{concatenation_attention.1} parent=27 // pred_fallthru
        _
      // Predicated region
      $region37: #{concatenation_attention.1} parent=27 // pred_check
        %p225 = pneg %p84
      $region38: #{concatenation_attention.1} parent=27 // pred_check_branch
        %227 = sbr.rel (%p225) target = $region40
      $region39: #{concatenation_attention.1} parent=27 // pred_region
        %s228 = smul.u32 2, %s12
        %p229 = scmp.lt.s32.totalorder %s228, 3
        %s230 = scalar_select %p229, %s228, 3
        %s231 = scalar_lea.vmem %s2, %s230
        %s232 = smul.u32 2, %s12
      $region40: #{concatenation_attention.1} parent=27 // pred_fallthru
        _
    $region28: #{concatenation_attention.1} parent=5 // pred_fallthru
      _
    %p233 = scmp.le.s32.totalorder 1, %s12
    %p234 = scmp.lt.s32.totalorder %s12, 3
    %p235 = pnand %p233, %p234
    %p236 = pneg %p235
    // Predicated region
    $region41: #{concatenation_attention.1} parent=5 // pred_check
      _
    $region42: #{concatenation_attention.1} parent=5 // pred_check_branch
      %238 = sbr.rel (%p235) target = $region44
    $region43: #{concatenation_attention.1} parent=5 // pred_region
      %s239 = ssub.s32 %s12, 1
      %s240 = smul.u32 2, %s17
      %p241 = scmp.lt.s32.totalorder %s240, 3
      %s242 = scalar_select %p241, %s240, 3
      %s243 = smul.addr %s242, 2
      %s244 = smul.addr %s243, 4
      %s245 = scalar_lea.vmem %s0, %s244
      %p246 = pneg %p38
      %p247 = pneg %p35
      %s248 = smul.u32 2, %s17
      %p249 = scmp.lt.s32.totalorder %s248, 3
      %s250 = scalar_select %p249, %s248, 3
      %s251 = scalar_lea.vmem %s1, %s250
      %p252 = pneg %p64
      %p253 = pneg %p61
      %s254 = smul.u32 2, %s17
      %p255 = scmp.lt.s32.totalorder %s254, 3
      %s256 = scalar_select %p255, %s254, 3
      %s257 = scalar_lea.vmem %s2, %s256
      %p258 = pneg %p90
      %p259 = pneg %p87
      %p260 = pneg %p111
      %p261 = pneg %p108
      %p262 = pneg %p132
      %p263 = pneg %p129
      %p264 = pneg %p153
      %p265 = pneg %p150
      %p266 = pneg %p179
      %p267 = pneg %p176
      %s268 = smul.u32 2, %s17
      %p269 = scmp.lt.s32.totalorder %s268, 3
      %s270 = scalar_select %p269, %s268, 3
      %s271 = scalar_lea.vmem %s6, %s270
      %s272 = smul.u32 2, %s17
      %p273 = scmp.lt.s32.totalorder %s272, 3
      %s274 = scalar_select %p273, %s272, 3
      %s275 = smul.addr %s274, 2
      %s276 = smul.addr %s275, 4
      %s277 = scalar_lea.vmem %s0, %s276
      %s278 = smul.u32 2, %s17
      %s279 = smul.u32 2, %s17
      %p280 = scmp.lt.s32.totalorder %s279, 3
      %s281 = scalar_select %p280, %s279, 3
      %s282 = scalar_lea.vmem %s1, %s281
      %s283 = smul.u32 2, %s17
      %s284 = smul.u32 2, %s17
      %p285 = scmp.lt.s32.totalorder %s284, 3
      %s286 = scalar_select %p285, %s284, 3
      %s287 = scalar_lea.vmem %s2, %s286
      %s288 = smul.u32 2, %s17
      %s289 = smul.u32 2, %s17
      %p290 = scmp.lt.s32.totalorder %s289, 3
      %s291 = scalar_select %p290, %s289, 3
      %s292 = scalar_lea.vmem %s6, %s291
      %s293 = smul.u32 2, %s17
      %v295 = vld [vmem:[%s277] sm:$0xf]
      %v296 = vld [vmem:[%s277 + $0x4] sm:$0xf]
      %v297 = vld [vmem:[%s277 + $0x8] sm:$0xf]
      %v298 = vld [vmem:[%s277 + $0xc] sm:$0xf]
      %v299 = vld [vmem:[%s3] sm:$0xf]
      %v300 = vld [vmem:[%s3 + $0x4] sm:$0xf]
      %v301 = vld [vmem:[%s3 + $0x8] sm:$0xf]
      %v302 = vld [vmem:[%s3 + $0xc] sm:$0xf]
      %v307 = vunpack.c.l.b16 %v295
      %v308 = vunpack.c.l.b16 %v296
      %v309 = vunpack.c.l.b16 %v297
      %v310 = vunpack.c.l.b16 %v298
      %v311 = vpack.c.b16 %v308, %v307
      %v312 = vpack.c.b16 %v310, %v309
      %v317 = vunpack.c.l.b16 %v299
      %v318 = vunpack.c.l.b16 %v300
      %v319 = vunpack.c.l.b16 %v301
      %v320 = vunpack.c.l.b16 %v302
      %v321 = vpack.c.b16 %v318, %v317
      %v322 = vpack.c.b16 %v320, %v319
      %vm325 = vcmask 261120
      %v327 = vsel %vm325, %v311, 0
      %v330 = vsel %vm325, %v312, 0
      %332 = vmatprep.subr.bf16.mxu0 0
      %333 = vmatpush1.bf16.msra.mxu0 %v321
      %334 = vmatprep.subr.bf16.mxu0 0
      %335 = vmatpush1.bf16.msra.mxu0 %v322
      %336 = vmatprep.subr.bf16.mxu0 0
      %337 = vmatpush1.bf16.msra.mxu0 0
      %338 = vmatprep.subr.bf16.mxu0 0
      %339 = vmatpush1.bf16.msra.mxu0 0
      %340 = vmatprep.subr.bf16.mxu0 0
      %341 = vmatpush1.bf16.msra.mxu0 0
      %342 = vmatprep.subr.bf16.mxu0 0
      %343 = vmatpush1.bf16.msra.mxu0 0
      %344 = vmatprep.subr.bf16.mxu0 0
      %345 = vmatpush1.bf16.msra.mxu0 0
      %346 = vmatprep.subr.bf16.mxu0 0
      %347 = vmatpush1.bf16.msra.mxu0 0
      %348 = vmatprep.subr.bf16.mxu0 0
      %349 = vmatpush1.bf16.msra.mxu0 0
      %350 = vmatprep.subr.bf16.mxu0 0
      %351 = vmatpush1.bf16.msra.mxu0 0
      %352 = vmatprep.subr.bf16.mxu0 0
      %353 = vmatpush1.bf16.msra.mxu0 0
      %354 = vmatprep.subr.bf16.mxu0 0
      %355 = vmatpush1.bf16.msra.mxu0 0
      %356 = vmatprep.subr.bf16.mxu0 0
      %357 = vmatpush1.bf16.msra.mxu0 0
      %358 = vmatprep.subr.bf16.mxu0 0
      %359 = vmatpush1.bf16.msra.mxu0 0
      %360 = vmatprep.subr.bf16.mxu0 0
      %361 = vmatpush1.bf16.msra.mxu0 0
      %362 = vmatprep.subr.bf16.mxu0 0
      %363 = vmatpush1.bf16.msra.mxu0 0
      %364 = vmatprep.mubr.bf16.mxu0 0
      %365 = vmatmul.mubr.bf16.gmra.mrb[0].mxu0 %v327
      %v366 = vpop.f32.mrb[0].mxu0
      %v367 = vadd.f32 0.0, %v366
      %v368 = vpop.f32.mrb[0].mxu0
      %v369 = vpop.f32.mrb[0].mxu0
      %v370 = vadd.f32 0.0, %v369
      %v371 = vpop.f32.mrb[0].mxu0
      %372 = vmatprep.mubr.bf16.mxu0 0
      %373 = vmatmul.mubr.bf16.gmra.mrb[0].mxu0 %v330
      %v374 = vpop.f32.mrb[0].mxu0
      %v375 = vadd.f32 0.0, %v374
      %v376 = vpop.f32.mrb[0].mxu0
      %v377 = vpop.f32.mrb[0].mxu0
      %v378 = vadd.f32 0.0, %v377
      %v379 = vpop.f32.mrb[0].mxu0
      %380 = vdwg.mxu0
      %v381 = vld [vmem:[%s4] sm:$0xf]
      %v382 = vld [vmem:[%s4 + $0x4] sm:$0xf]
      %v383 = vld [vmem:[%s4 + $0x8] sm:$0xf]
      %v384 = vld [vmem:[%s4 + $0xc] sm:$0xf]
      %v389 = vunpack.c.l.b16 %v381
      %v390 = vunpack.c.l.b16 %v382
      %v391 = vunpack.c.l.b16 %v383
      %v392 = vunpack.c.l.b16 %v384
      %v393 = vpack.c.b16 %v390, %v389
      %v394 = vpack.c.b16 %v392, %v391
      %397 = vmatprep.subr.bf16.mxu0 0
      %398 = vmatpush1.bf16.msra.mxu0 %v393
      %399 = vmatprep.subr.bf16.mxu0 0
      %400 = vmatpush1.bf16.msra.mxu0 %v394
      %401 = vmatprep.subr.bf16.mxu0 0
      %402 = vmatpush1.bf16.msra.mxu0 0
      %403 = vmatprep.subr.bf16.mxu0 0
      %404 = vmatpush1.bf16.msra.mxu0 0
      %405 = vmatprep.subr.bf16.mxu0 0
      %406 = vmatpush1.bf16.msra.mxu0 0
      %407 = vmatprep.subr.bf16.mxu0 0
      %408 = vmatpush1.bf16.msra.mxu0 0
      %409 = vmatprep.subr.bf16.mxu0 0
      %410 = vmatpush1.bf16.msra.mxu0 0
      %411 = vmatprep.subr.bf16.mxu0 0
      %412 = vmatpush1.bf16.msra.mxu0 0
      %413 = vmatprep.subr.bf16.mxu0 0
      %414 = vmatpush1.bf16.msra.mxu0 0
      %415 = vmatprep.subr.bf16.mxu0 0
      %416 = vmatpush1.bf16.msra.mxu0 0
      %417 = vmatprep.subr.bf16.mxu0 0
      %418 = vmatpush1.bf16.msra.mxu0 0
      %419 = vmatprep.subr.bf16.mxu0 0
      %420 = vmatpush1.bf16.msra.mxu0 0
      %421 = vmatprep.subr.bf16.mxu0 0
      %422 = vmatpush1.bf16.msra.mxu0 0
      %423 = vmatprep.subr.bf16.mxu0 0
      %424 = vmatpush1.bf16.msra.mxu0 0
      %425 = vmatprep.subr.bf16.mxu0 0
      %426 = vmatpush1.bf16.msra.mxu0 0
      %427 = vmatprep.subr.bf16.mxu0 0
      %428 = vmatpush1.bf16.msra.mxu0 0
      %429 = vmatprep.mubr.bf16.mxu0 0
      %430 = vmatmul.mubr.bf16.gmra.mrb[0].mxu0 %v327
      %v431 = vpop.f32.mrb[0].mxu0
      %v432 = vadd.f32 0.0, %v431
      %v433 = vpop.f32.mrb[0].mxu0
      %v434 = vpop.f32.mrb[0].mxu0
      %v435 = vadd.f32 0.0, %v434
      %v436 = vpop.f32.mrb[0].mxu0
      %437 = vmatprep.mubr.bf16.mxu0 0
      %438 = vmatmul.mubr.bf16.gmra.mrb[0].mxu0 %v330
      %v439 = vpop.f32.mrb[0].mxu0
      %v440 = vadd.f32 0.0, %v439
      %v441 = vpop.f32.mrb[0].mxu0
      %v442 = vpop.f32.mrb[0].mxu0
      %v443 = vadd.f32 0.0, %v442
      %v444 = vpop.f32.mrb[0].mxu0
      %445 = vdwg.mxu0
      %v446 = vld [vmem:[%s282] sm:$0x1]
      %v447 = vld [vmem:[%s282 + $0x1] sm:$0x1]
      %v450 = vlaneseq
      %v451 = vshrl.u32 %v450, 7
      %v452 = vsub.s32 0, %v451
      %v453 = vrot.slane %v446, %v452
      %v454 = vlaneseq
      %v455 = vshrl.u32 %v454, 7
      %v456 = vsub.s32 0, %v455
      %v457 = vrot.slane %v447, %v456
      %v460 = vadd.f32 %v367, %v453
      %v461 = vadd.f32 %v370, %v453
      %v462 = vadd.f32 %v375, %v457
      %v463 = vadd.f32 %v378, %v457
      %v464 = vld [vmem:[%s287] sm:$0x1]
      %v465 = vld [vmem:[%s287 + $0x1] sm:$0x1]
      %v468 = vlaneseq
      %v469 = vshrl.u32 %v468, 7
      %v470 = vsub.s32 0, %v469
      %v471 = vrot.slane %v464, %v470
      %v472 = vlaneseq
      %v473 = vshrl.u32 %v472, 7
      %v474 = vsub.s32 0, %v473
      %v475 = vrot.slane %v465, %v474
      %v478 = vadd.f32 %v432, %v471
      %v479 = vadd.f32 %v435, %v471
      %v480 = vadd.f32 %v440, %v475
      %v481 = vadd.f32 %v443, %v475
      %v482 = vtanh.pop %v460
      %v483 = vtanh.pop %v461
      %v484 = vtanh.pop %v462
      %v485 = vtanh.pop %v463
      %v486 = vxor.u32 %v478, 2147483648
      %v487 = vxor.u32 %v479, 2147483648
      %v488 = vxor.u32 %v480, 2147483648
      %v489 = vxor.u32 %v481, 2147483648
      %v490 = vmul.f32 %v486, 1.442695
      %v491 = vpow.pop %v490
      %v492 = vmul.f32 %v487, 1.442695
      %v493 = vpow.pop %v492
      %v494 = vmul.f32 %v488, 1.442695
      %v495 = vpow.pop %v494
      %v496 = vmul.f32 %v489, 1.442695
      %v497 = vpow.pop %v496
      %v498 = vadd.f32 %v491, 1.0
      %v499 = vadd.f32 %v493, 1.0
      %v500 = vadd.f32 %v495, 1.0
      %v501 = vadd.f32 %v497, 1.0
      %v502 = vrcp.pop %v498
      %v503 = vmul.f32 1.0, %v502
      %v504 = vrcp.pop %v499
      %v505 = vmul.f32 1.0, %v504
      %v506 = vrcp.pop %v500
      %v507 = vmul.f32 1.0, %v506
      %v508 = vrcp.pop %v501
      %v509 = vmul.f32 1.0, %v508
      %v510 = vmul.f32 %v482, %v503
      %v511 = vmul.f32 %v483, %v505
      %v512 = vmul.f32 %v484, %v507
      %v513 = vmul.f32 %v485, %v509
      %v514 = vld [vmem:[%s5] sm:$0x1]
      %v516 = vlaneseq
      %v517 = vshrl.u32 %v516, 7
      %v518 = vsub.s32 0, %v517
      %v519 = vrot.slane %v514, %v518
      %v521 = vmul.f32 %v510, %v519
      %v522 = vmul.f32 %v511, %v519
      %v523 = vmul.f32 %v512, %v519
      %v524 = vmul.f32 %v513, %v519
      %v525 = vsel %vm325, %v521, 0.0
      %526 = vadd.xlane.f32.xlu0 %v525
      %v527 = vpop.xlane.xlu0 %526
      %v528 = vsel %vm325, %v522, 0.0
      %529 = vadd.xlane.f32.xlu0 %v528
      %v530 = vpop.xlane.xlu0 %529
      %v531 = vsel %vm325, %v523, 0.0
      %532 = vadd.xlane.f32.xlu0 %v531
      %v533 = vpop.xlane.xlu0 %532
      %v534 = vsel %vm325, %v524, 0.0
      %535 = vadd.xlane.f32.xlu0 %v534
      %v536 = vpop.xlane.xlu0 %535
      %v541 = vlaneseq
      %v542 = vand.u32 %v541, 127
      %v543 = vlaneseq
      %v544 = vshrl.u32 %v543, 7
      %v545 = vsub.s32 %v542, %v544
      %v546 = vrot.slane %v527, %v545
      %v547 = vadd.s32 %v542, 4294967288
      %v548 = vlaneseq
      %v549 = vshrl.u32 %v548, 7
      %v550 = vsub.s32 %v547, %v549
      %v551 = vrot.slane %v530, %v550
      %vm552 = vcmask 130112
      %v553 = vsel %vm552, %v551, %v546
      %v554 = vlaneseq
      %v555 = vshrl.u32 %v554, 7
      %v556 = vsub.s32 %v542, %v555
      %v557 = vrot.slane %v533, %v556
      %v558 = vlaneseq
      %v559 = vshrl.u32 %v558, 7
      %v560 = vsub.s32 %v547, %v559
      %v561 = vrot.slane %v536, %v560
      %v562 = vsel %vm552, %v561, %v557
      %vm563 = vcmask 1041409
      %v564 = vsel %vm563, %v562, %v553
      %vm566 = vcmask 123904
      %v567 = vsel %vm566, %v564, -inf
      %568 = vmax.xlane.f32.xlu0 %v567
      %v569 = vpop.xlane.xlu0 %568
      %v571 = vlaneseq
      %v572 = vshrl.u32 %v571, 7
      %v573 = vsub.s32 0, %v572
      %v574 = vrot.slane %v569, %v573
      %v575 = vlaneseq
      %v576 = vshrl.u32 %v575, 7
      %v577 = vsub.s32 1, %v576
      %v578 = vrot.slane %v569, %v577
      %v581 = vsub.f32 %v527, %v574
      %v582 = vsub.f32 %v530, %v574
      %v583 = vsub.f32 %v533, %v578
      %v584 = vsub.f32 %v536, %v578
      %v585 = vmul.f32 %v581, 1.442695
      %v586 = vpow.pop %v585
      %v587 = vmul.f32 %v582, 1.442695
      %v588 = vpow.pop %v587
      %v589 = vmul.f32 %v583, 1.442695
      %v590 = vpow.pop %v589
      %v591 = vmul.f32 %v584, 1.442695
      %v592 = vpow.pop %v591
      %597 = vset.pattern.permute.xlu0 0
      %598 = vperm.xlu0 %597, %v586
      %v599 = vpop.permute.xlu0 %598
      %600 = vset.pattern.permute.xlu0 0
      %601 = vperm.xlu0 %600, %v588
      %v602 = vpop.permute.xlu0 %601
      %603 = vset.pattern.permute.xlu0 0
      %604 = vperm.xlu0 %603, %v590
      %v605 = vpop.permute.xlu0 %604
      %606 = vset.pattern.permute.xlu0 0
      %607 = vperm.xlu0 %606, %v592
      %v608 = vpop.permute.xlu0 %607
      %v609 = vlaneseq
      %v610 = vshrl.u32 %v609, 7
      %v611 = vsub.s32 %v542, %v610
      %v612 = vrot.slane %v599, %v611
      %v613 = vlaneseq
      %v614 = vshrl.u32 %v613, 7
      %v615 = vsub.s32 %v547, %v614
      %v616 = vrot.slane %v602, %v615
      %v617 = vsel %vm552, %v616, %v612
      %v618 = vlaneseq
      %v619 = vshrl.u32 %v618, 7
      %v620 = vsub.s32 %v542, %v619
      %v621 = vrot.slane %v605, %v620
      %v622 = vlaneseq
      %v623 = vshrl.u32 %v622, 7
      %v624 = vsub.s32 %v547, %v623
      %v625 = vrot.slane %v608, %v624
      %v626 = vsel %vm552, %v625, %v621
      %v627 = vsel %vm563, %v626, %v617
      %v629 = vsel %vm566, %v627, 0.0
      %630 = vadd.xlane.f32.xlu0 %v629
      %v631 = vpop.xlane.xlu0 %630
      %v632 = vrcp.pop %v631
      %v634 = vlaneseq
      %v635 = vshrl.u32 %v634, 7
      %v636 = vsub.s32 0, %v635
      %v637 = vrot.slane %v632, %v636
      %v638 = vlaneseq
      %v639 = vshrl.u32 %v638, 7
      %v640 = vsub.s32 1, %v639
      %v641 = vrot.slane %v632, %v640
      %v644 = vmul.f32 %v586, %v637
      %v645 = vmul.f32 %v588, %v637
      %v646 = vmul.f32 %v590, %v641
      %v647 = vmul.f32 %v592, %v641
      %652 = vset.pattern.permute.xlu0 0
      %653 = vperm.xlu0 %652, %v644
      %v654 = vpop.permute.xlu0 %653
      %655 = vset.pattern.permute.xlu0 0
      %656 = vperm.xlu0 %655, %v645
      %v657 = vpop.permute.xlu0 %656
      %658 = vset.pattern.permute.xlu0 0
      %659 = vperm.xlu0 %658, %v646
      %v660 = vpop.permute.xlu0 %659
      %661 = vset.pattern.permute.xlu0 0
      %662 = vperm.xlu0 %661, %v647
      %v663 = vpop.permute.xlu0 %662
      %v664 = vlaneseq
      %v665 = vshrl.u32 %v664, 7
      %v666 = vsub.s32 %v542, %v665
      %v667 = vrot.slane %v654, %v666
      %v668 = vlaneseq
      %v669 = vshrl.u32 %v668, 7
      %v670 = vsub.s32 %v547, %v669
      %v671 = vrot.slane %v657, %v670
      %v672 = vsel %vm552, %v671, %v667
      %v673 = vlaneseq
      %v674 = vshrl.u32 %v673, 7
      %v675 = vsub.s32 %v542, %v674
      %v676 = vrot.slane %v660, %v675
      %v677 = vlaneseq
      %v678 = vshrl.u32 %v677, 7
      %v679 = vsub.s32 %v547, %v678
      %v680 = vrot.slane %v663, %v679
      %v681 = vsel %vm552, %v680, %v676
      %vm684 = vcmask 122880
      %685 = vst.msk [vmem:[%s292] sm:$0x1] %vm684, %v672
      %686 = vst.msk [vmem:[%s292 + $0x1] sm:$0x1] %vm684, %v681
      %s687 = smul.u32 2, %s17
      %p688 = scmp.lt.s32.totalorder %s687, 3
      %s689 = scalar_select %p688, %s687, 3
      %s690 = scalar_lea.vmem %s6, %s689
      // Predicated region
      $region45: #{concatenation_attention.1} parent=43 // pred_check
        %p691 = pneg %p176
      $region46: #{concatenation_attention.1} parent=43 // pred_check_branch
        %693 = sbr.rel (%p691) target = $region48
      $region47: #{concatenation_attention.1} parent=43 // pred_region
        %s694 = smul.u32 2, %s17
      $region48: #{concatenation_attention.1} parent=43 // pred_fallthru
        _
    $region44: #{concatenation_attention.1} parent=5 // pred_fallthru
      _
    %p695 = scmp.le.s32.totalorder 2, %s12
    // Predicated region
    $region49: #{concatenation_attention.1} parent=5 // pred_check
      %p696 = pneg %p695
    $region50: #{concatenation_attention.1} parent=5 // pred_check_branch
      %698 = sbr.rel (%p696) target = $region52
    $region51: #{concatenation_attention.1} parent=5 // pred_region
      %s699 = ssub.s32 %s12, 2
      // Predicated region
      $region53: #{concatenation_attention.1} parent=51 // pred_check
        %p700 = pneg %p182
      $region54: #{concatenation_attention.1} parent=51 // pred_check_branch
        %702 = sbr.rel (%p700) target = $region56
      $region55: #{concatenation_attention.1} parent=51 // pred_region
        %s703 = smul.u32 2, %s18
        %p704 = scmp.lt.s32.totalorder %s703, 3
        %s705 = scalar_select %p704, %s703, 3
        %s706 = scalar_lea.vmem %s6, %s705
      $region56: #{concatenation_attention.1} parent=51 // pred_fallthru
        _
    $region52: #{concatenation_attention.1} parent=5 // pred_fallthru
      _
  $region6: #{concatenation_attention.1} parent=0 // loop_footer
    %s16 = sadd.s32 1, %s12
  $region7: #{concatenation_attention.1} parent=0 // loop_footer_branch
    %11 = sbr.rel target = $region3
  $region8: #{concatenation_attention.1} parent=0 // loop_exit
    _

</llo_original>
